<compile_context>
chip_gen: v6e
topology: v6e:2x2x1
jax: 0.10.0
libtpu: 0.0.40
codegen_flags: <defaults>
</compile_context>

<pallas_src>
import functools

import jax
import jax.numpy as jnp
from jax.experimental import pallas as pl
from jax.experimental.pallas import tpu as pltpu


# ----------------------------------------------------------------------------
# Helpers
# ----------------------------------------------------------------------------
def _round_up(x, m):
    return (x + m - 1) // m * m


def _vmem_budget():
    """Return (input-block budget bytes, vmem_limit_bytes) per TPU generation."""
    small = (6 * 1024 * 1024, 40 * 1024 * 1024)    # safe on v7x (64 MiB VMEM/TC)
    large = (12 * 1024 * 1024, 64 * 1024 * 1024)   # v5e / v6e (128 MiB VMEM)
    try:
        info = pltpu.get_tpu_info()
        cap = getattr(info, "vmem_capacity_bytes", None)
    except Exception:
        return small
    if cap is None or cap <= 96 * 1024 * 1024:
        return small
    return large


def _pick_row_tile(n_rows, pack, rows_budget):
    """Largest pack-aligned row tile within budget; keep >=2 tiles (v7x 2 TCs)."""
    if n_rows <= pack:
        return n_rows                      # full extent — always a legal block
    rows_budget = max(pack, rows_budget // pack * pack)
    rt_split = _round_up(pl.cdiv(n_rows, 2), pack)
    return max(pack, min(rows_budget, rt_split))


# ----------------------------------------------------------------------------
# Kernels
# ----------------------------------------------------------------------------
def _gap_kernel_single(x_ref, o_ref, *, inv_hw):
    """Whole H*W per block: x_ref [Rt, HW] -> o_ref [Rt, 1]."""
    x = x_ref[...].astype(jnp.float32)
    s = jnp.sum(x, axis=-1, keepdims=True)
    o_ref[...] = (s * inv_hw).astype(o_ref.dtype)


def _gap_kernel_multi(x_ref, o_ref, acc_ref, *, inv_hw, hwt, hw_total, mask_tail):
    """H*W split across grid axis 1 ("arbitrary").

    x_ref  : [Rt, HWt]   (HWt % 128 == 0)
    o_ref  : [Rt, 1]     written on the last HW step
    acc_ref: [Rt, 128]   f32 lane-shaped partial sums (VPU-only hot loop)
    """
    h = pl.program_id(1)

    @pl.when(h == 0)
    def _init():
        acc_ref[...] = jnp.zeros_like(acc_ref)

    x = x_ref[...].astype(jnp.float32)
    if mask_tail:
        lane = jax.lax.broadcasted_iota(jnp.int32, x.shape, 1)
        x = jnp.where(lane + h * hwt < hw_total, x, 0.0)

    # Fold 128-lane groups with pure VPU adds; cross-lane reduce is deferred.
    part = x[:, 0:128]
    for g in range(1, hwt // 128):
        part = part + x[:, g * 128:(g + 1) * 128]
    acc_ref[...] += part

    @pl.when(h == pl.num_programs(1) - 1)
    def _finalize():
        s = jnp.sum(acc_ref[...], axis=-1, keepdims=True)   # one XLU reduce
        o_ref[...] = (s * inv_hw).astype(o_ref.dtype)


# ----------------------------------------------------------------------------
# Wrapper
# ----------------------------------------------------------------------------
@jax.jit
def global_avg_pool_2d(x):
    """x: [N, C, H, W]  ->  [N, C, 1, 1]  (mean over H, W, keepdim)."""
    N, C, H, W = x.shape
    R, HW = N * C, H * W
    itemsize = x.dtype.itemsize
    inv_hw = 1.0 / float(HW)
    pack = max(8, 32 // itemsize)            # sublane pack: 8 f32 / 16 bf16 / 32 i8

    x2 = x.reshape(R, HW)                    # metadata-only (NCHW is contiguous)

    block_budget, vmem_limit = _vmem_budget()
    cost = pl.CostEstimate(
        flops=R * HW,
        transcendentals=0,
        bytes_accessed=R * HW * itemsize + R * itemsize,
    )

    # VMEM lane dim is padded to multiples of 128 — budget on the padded size.
    row_vmem_bytes = _round_up(HW, 128) * itemsize

    if min(R, pack) * row_vmem_bytes <= block_budget:
        # --- Common case: full H*W on lanes, single grid axis over rows. ---
        rt = _pick_row_tile(R, pack, block_budget // row_vmem_bytes)
        out = pl.pallas_call(
            functools.partial(_gap_kernel_single, inv_hw=inv_hw),
            out_shape=jax.ShapeDtypeStruct((R, 1), x.dtype),
            grid_spec=pltpu.PrefetchScalarGridSpec(
                num_scalar_prefetch=0,
                grid=(pl.cdiv(R, rt),),
                in_specs=[pl.BlockSpec((rt, HW), lambda r: (r, 0))],
                out_specs=pl.BlockSpec((rt, 1), lambda r: (r, 0)),
            ),
            compiler_params=pltpu.CompilerParams(
                dimension_semantics=("parallel",),
                vmem_limit_bytes=vmem_limit,
            ),
            cost_estimate=cost,
        )(x2)
    else:
        # --- Huge spatial: split H*W into 128-aligned lane tiles. ---
        hwt = max(128, min(4096, HW // 128 * 128))
        rt = _pick_row_tile(R, pack, block_budget // (hwt * itemsize))
        mask_tail = (HW % hwt) != 0
        out = pl.pallas_call(
            functools.partial(_gap_kernel_multi, inv_hw=inv_hw, hwt=hwt,
                              hw_total=HW, mask_tail=mask_tail),
            out_shape=jax.ShapeDtypeStruct((R, 1), x.dtype),
            grid_spec=pltpu.PrefetchScalarGridSpec(
                num_scalar_prefetch=0,
                grid=(pl.cdiv(R, rt), pl.cdiv(HW, hwt)),
                in_specs=[pl.BlockSpec((rt, hwt), lambda r, h: (r, h))],
                out_specs=pl.BlockSpec((rt, 1), lambda r, h: (r, 0)),
                scratch_shapes=[pltpu.VMEM((rt, 128), jnp.float32)],
            ),
            compiler_params=pltpu.CompilerParams(
                dimension_semantics=("parallel", "arbitrary"),
                vmem_limit_bytes=vmem_limit,
            ),
            cost_estimate=cost,
        )(x2)

    # [N*C, 1] -> [N, C, 1, 1] (metadata only on a tiny tensor).
    return out.reshape(N, C, 1, 1)


# ----------------------------------------------------------------------------
if __name__ == "__main__":
    key = jax.random.PRNGKey(0)
    N, C, H, W = 2, 4, 16, 16
    x = jax.random.normal(key, (N, C, H, W), jnp.float32)

    out = jax.block_until_ready(global_avg_pool_2d(x))

    assert out.shape == (N, C, 1, 1), out.shape
    ref = jnp.mean(x, axis=(2, 3), keepdims=True)
    assert bool(jnp.all(jnp.isfinite(out)))
    assert jnp.allclose(out, ref, atol=1e-5, rtol=1e-5), float(
        jnp.max(jnp.abs(out - ref)))

    print("KERNEL_OK")
</pallas_src>

<mosaic_0001>
module attributes {stable_mosaic.version = 11 : i64} {
  func.func @_gap_kernel_single(%arg0: i32, %arg1: memref<8x256xf32, #tpu.memory_space<vmem>>, %arg2: memref<8x1xf32, #tpu.memory_space<vmem>>) attributes {dimension_semantics = [#tpu.dimension_semantics<parallel>], iteration_bounds = array<i64: 1>, scalar_prefetch = 0 : i64, scratch_operands = 0 : i64, tpu.core_type = #tpu.core_type<tc>, window_params = [{transform_indices = @transform_0, window_bounds = array<i64: 8, 256>}, {transform_indices = @transform_1, window_bounds = array<i64: 8, 1>}]} {
    %c0 = arith.constant 0 : index
    %c0_0 = arith.constant 0 : index
    %0 = vector.load %arg1[%c0, %c0_0] : memref<8x256xf32, #tpu.memory_space<vmem>>, vector<8x256xf32>
    %cst = arith.constant dense<0.000000e+00> : vector<8xf32>
    %1 = vector.multi_reduction <add>, %0, %cst [1] : vector<8x256xf32> to vector<8xf32>
    %2 = vector.shape_cast %1 : vector<8xf32> to vector<8x1xf32>
    %cst_1 = arith.constant 3.906250e-03 : f32
    %3 = vector.broadcast %cst_1 : f32 to vector<8x1xf32>
    %4 = arith.mulf %2, %3 : vector<8x1xf32>
    %c0_2 = arith.constant 0 : index
    %c0_3 = arith.constant 0 : index
    %5 = vector.load %arg2[%c0_2, %c0_3] : memref<8x1xf32, #tpu.memory_space<vmem>>, vector<8x1xf32>
    tpu.vector_store %arg2[%c0_2, %c0_3], %4 {strides = array<i32>} : memref<8x1xf32, #tpu.memory_space<vmem>>, vector<8x1xf32>,
    return
  }
  func.func @transform_0(%arg0: i32) -> (i32, i32) {
    %c0_i32 = arith.constant 0 : i32
    %c0_i32_0 = arith.constant 0 : i32
    return %arg0, %c0_i32 : i32, i32
  }
  func.func @transform_1(%arg0: i32) -> (i32, i32) {
    %c0_i32 = arith.constant 0 : i32
    %c0_i32_0 = arith.constant 0 : i32
    return %arg0, %c0_i32 : i32, i32
  }
}

</mosaic_0001>

<llo_original>
// kernel: global_avg_pool_2d.1
$region0: #{global_avg_pool_2d.1}
  #allocation0 [shape = 'u32[]', space=smem, size = 0x4, offset = 0x4, fixed_abs, tag = 'smem constant byte address 0x4 - core index']
  #allocation1 [shape = 'u32[144,128]{1,0:T(1,128)}', space=vmem, size = 0x12000, scoped, tag = 'internal scratch']
  %s0 = inlined_call_operand.vmem [shape: f32[8,256], index: 0, kind: input, shape index: {}]
  %s1 = inlined_call_operand.vmem [shape: f32[8,1], index: 1, kind: output, shape index: {}]
  %s2 = sld [smem:[#allocation0]]
  $region14: #{global_avg_pool_2d.1} parent=0
    _
  %s4 = ssub.s32 1, %s2
  %s5 = scalar_select 0, %s4, %s2
  // Predicated region
  $region2: #{global_avg_pool_2d.1} parent=0 // pred_check
    _
  $region3: #{global_avg_pool_2d.1} parent=0 // pred_check_branch
    %7 = sbr.rel (0) target = $region5
  $region4: #{global_avg_pool_2d.1} parent=0 // pred_region
    _
  $region5: #{global_avg_pool_2d.1} parent=0 // pred_fallthru
    _
  %v8 = vld [vmem:[%s0] sm:$0xff]
  %v9 = vld [vmem:[%s0 + $0x8] sm:$0xff]
  %v10 = vadd.f32 %v8, %v9
  %11 = vadd.xlane.f32.xlu0 %v10
  %v12 = vpop.xlane.xlu0 %11
  %v13 = vmul.f32 %v12, 0.00390625
  %vm14 = vcmask 7168
  %15 = vst.msk [vmem:[%s1] sm:$0xff] %vm14, %v13
  // Predicated region
  $region6: #{global_avg_pool_2d.1} parent=0 // pred_check
    _
  $region7: #{global_avg_pool_2d.1} parent=0 // pred_check_branch
    %17 = sbr.rel (0) target = $region9
  $region8: #{global_avg_pool_2d.1} parent=0 // pred_region
    _
  $region9: #{global_avg_pool_2d.1} parent=0 // pred_fallthru
    _
  // Predicated region
  $region10: #{global_avg_pool_2d.1} parent=0 // pred_check
    _
  $region11: #{global_avg_pool_2d.1} parent=0 // pred_check_branch
    %19 = sbr.rel (0) target = $region13
  $region12: #{global_avg_pool_2d.1} parent=0 // pred_region
    _
  $region13: #{global_avg_pool_2d.1} parent=0 // pred_fallthru
    _

</llo_original>
